<compile_context>
chip_gen: v5e
topology: v5e:2x2
jax: 0.10.0
libtpu: 0.0.40
codegen_flags: <defaults>
</compile_context>

<pallas_src>
import jax
import jax.numpy as jnp
from jax import lax
from jax.experimental import pallas as pl
from jax.experimental.pallas import tpu as pltpu


def _round_up(x, m):
    return ((x + m - 1) // m) * m


def fused_head_kernel(x_ref, w_ref, b_ref, o_ref):
    """out = x @ w + b — the entire BertCNN head is one MXU GEMM.

    x_ref : (bm, D)      bf16 flattened last-window activations (taps * hidden)
    w_ref : (D, C_pad)   bf16 conv taps folded into the classifier weight
    b_ref : (1, C_pad)   f32 classifier bias (lane-padded)
    o_ref : (bm, C_pad)  f32
    """
    y = jnp.dot(x_ref[...], w_ref[...], preferred_element_type=jnp.float32)
    o_ref[...] = (y + b_ref[...]).astype(o_ref.dtype)


def fuse_head_weights(conv_w, cls_w, kernel_size, seq_len):
    """Fold the (bias-free) Conv1d taps into the classifier weight.

    Depends only on the model parameters and seq_len -> hoist out of the
    per-request path (constant-folds under jit when the weights are constants).

    Returns (w_real, start, n_real) where w_real has shape (n_real, H, C) and
    the conv output at the last time step only reads emb[:, start:start+n_real].
    """
    K = kernel_size
    pad = (K - 1) // 2
    # torch Conv1d is cross-correlation: y[b,o,t] = sum_{i,k} w[o,i,k]*x_pad[b,i,t+k]
    conv_taps = jnp.transpose(conv_w, (2, 1, 0))              # (K, H_in, H_out)
    w_fused = jnp.einsum("kio,co->kic", conv_taps, cls_w)     # (K, H_in, C)

    # Conv output length (stride 1) is L = S + 2*pad - K + 1; the module takes
    # index -1, i.e. t_last = L - 1.  Tap k of that output reads original row
    # t_last - pad + k, which is real only while it lies inside [0, S-1].
    t_last = seq_len + 2 * pad - K
    k_lo = max(0, pad - t_last)
    k_hi = min(K - 1, seq_len - 1 - t_last + pad)
    start = t_last - pad + k_lo
    n_real = k_hi - k_lo + 1
    w_real = w_fused[k_lo:k_hi + 1]                           # (n_real, H, C)
    return w_real, start, n_real


def bert_cnn_forward(emb, conv_w, cls_w, cls_b, kernel_size):
    """emb: (B, S, H) "BERT last hidden state"; conv_w: (C_out, C_in, K) torch
    layout; cls_w: (num_classes, H); cls_b: (num_classes,).
    Returns (B, num_classes) == classify(conv(emb.T).T[:, -1, :])."""
    B, S, H = emb.shape
    C = cls_w.shape[0]

    # ---- static weight prep (tiny; cache / constant-fold for serving) ------
    w_real, start, n_real = fuse_head_weights(conv_w, cls_w, kernel_size, S)
    D = n_real * H

    # Only the last receptive-field window of the activations is live.
    window = lax.slice_in_dim(emb, start, start + n_real, axis=1)  # (B, n_real, H)
    x2d = window.reshape(B, D)          # free (contiguous row-major) reshape
    w2d = w_real.reshape(D, C)

    # ---- tile / alignment choices -------------------------------------------
    C_pad = _round_up(C, 128)           # lane-dense output -> unmasked stores
    B8 = _round_up(B, 8)                # sublane-aligned batch
    if B8 <= 128:
        bm = B8                         # tiny batch: single grid step
    elif B8 <= 1024:
        # >=2 grid steps so the "parallel" axis shards across both v7x TCs;
        # bm a multiple of 128 keeps v5e's 128x128 MXU passes full.
        bm = _round_up(B8 // 2, 128)
    else:
        bm = 512                        # amortize ~0.35us/step grid overhead
    B_pad = _round_up(B8, bm)

    # The only wrapper-side copy: batch-pad + bf16 cast of the small window.
    # No contraction-dim padding (block spans full D; Mosaic lane-pads free).
    x_p = jnp.pad(x2d, ((0, B_pad - B), (0, 0))).astype(jnp.bfloat16)
    w_p = jnp.pad(w2d, ((0, 0), (0, C_pad - C))).astype(jnp.bfloat16)
    b_p = jnp.pad(cls_b.reshape(1, C), ((0, 0), (0, C_pad - C))).astype(jnp.float32)

    cost = pl.CostEstimate(
        flops=2 * B_pad * D * C_pad,
        transcendentals=0,
        bytes_accessed=2 * (B_pad * D + D * C_pad)          # bf16 inputs
                       + 4 * (C_pad + B_pad * C_pad),       # f32 bias + output
    )

    # TODO(synk): for BERT-large-ish D (>=4k) on v7x (64 MiB VMEM), consider
    # pipeline_mode=pl.Buffered(1) on the grid-invariant weight/bias specs
    # and/or an explicit vmem_limit_bytes; irrelevant at these sizes.
    out_p = pl.pallas_call(
        fused_head_kernel,
        out_shape=jax.ShapeDtypeStruct((B_pad, C_pad), jnp.float32),
        grid=(B_pad // bm,),
        in_specs=[
            pl.BlockSpec((bm, D), lambda i: (i, 0)),
            pl.BlockSpec((D, C_pad), lambda i: (0, 0)),
            pl.BlockSpec((1, C_pad), lambda i: (0, 0)),
        ],
        out_specs=pl.BlockSpec((bm, C_pad), lambda i: (i, 0)),
        compiler_params=pltpu.CompilerParams(
            dimension_semantics=("parallel",)),
        cost_estimate=cost,
    )(x_p, w_p, b_p)

    return out_p[:B, :C]


if __name__ == "__main__":
    # Small shapes consistent with the module's forward:
    #   x: (batch, seq_len) token ids -> bert -> (B, S, H) -> conv -> linear
    B, S, H, K, C, VOCAB = 2, 8, 32, 3, 5, 50

    key = jax.random.PRNGKey(0)
    k1, k2, k3, k4, k5 = jax.random.split(key, 5)

    token_ids = jax.random.randint(k1, (B, S), 0, VOCAB)
    embed_table = jax.random.normal(k2, (VOCAB, H), jnp.float32)
    conv_w = 0.1 * jax.random.normal(k3, (H, H, K), jnp.float32)   # Conv1d (C_out, C_in, K), bias=False
    cls_w = 0.1 * jax.random.normal(k4, (C, H), jnp.float32)       # Linear weight (num_classes, H)
    cls_b = 0.1 * jax.random.normal(k5, (C,), jnp.float32)         # Linear bias

    # TODO(synk): the pretrained BERT encoder (load_bert + bert_embedding) has no
    # in-script equivalent; a deterministic token-embedding lookup stands in for
    # "get_bert_last_hidden_state(bert_embedding(x))" producing (B, S, H).
    emb = jnp.take(embed_table, token_ids, axis=0)                  # (B, S, H)

    fwd = jax.jit(bert_cnn_forward, static_argnums=(4,))
    out = fwd(emb, conv_w, cls_w, cls_b, K)
    out = jax.block_until_ready(out)

    # Silent cross-check vs. a pure-JAX f32 reference of the exact module math
    # (conv -> last step -> linear).  Tolerance sized for the bf16 operand cast.
    pad = (K - 1) // 2
    ref = lax.conv_general_dilated(
        jnp.transpose(emb, (0, 2, 1)), conv_w, (1,), [(pad, pad)],
        dimension_numbers=("NCH", "OIH", "NCH"))
    ref = jnp.transpose(ref, (0, 2, 1))[:, -1, :] @ cls_w.T + cls_b
    assert out.shape == (B, C)
    assert jnp.allclose(out, ref, atol=2e-2, rtol=2e-2)

    print("KERNEL_OK")
</pallas_src>

<mosaic_0001>
module attributes {stable_mosaic.version = 11 : i64} {
  func.func @fused_head_kernel(%arg0: i32, %arg1: memref<8x64xbf16, #tpu.memory_space<vmem>>, %arg2: memref<64x128xbf16, #tpu.memory_space<vmem>>, %arg3: memref<1x128xf32, #tpu.memory_space<vmem>>, %arg4: memref<8x128xf32, #tpu.memory_space<vmem>>) attributes {dimension_semantics = [#tpu.dimension_semantics<parallel>], iteration_bounds = array<i64: 1>, scalar_prefetch = 0 : i64, scratch_operands = 0 : i64, tpu.core_type = #tpu.core_type<tc>, window_params = [{transform_indices = @transform_0, window_bounds = array<i64: 8, 64>}, {pipeline_mode = #tpu.pipeline_mode<synchronous>, transform_indices = @transform_1, window_bounds = array<i64: 64, 128>}, {pipeline_mode = #tpu.pipeline_mode<synchronous>, transform_indices = @transform_2, window_bounds = array<i64: 1, 128>}, {transform_indices = @transform_3, window_bounds = array<i64: 8, 128>}]} {
    %c0 = arith.constant 0 : index
    %c0_0 = arith.constant 0 : index
    %0 = vector.load %arg1[%c0, %c0_0] : memref<8x64xbf16, #tpu.memory_space<vmem>>, vector<8x64xbf16>
    %c0_1 = arith.constant 0 : index
    %c0_2 = arith.constant 0 : index
    %1 = vector.load %arg2[%c0_1, %c0_2] : memref<64x128xbf16, #tpu.memory_space<vmem>>, vector<64x128xbf16>
    %cst = arith.constant dense<0.000000e+00> : vector<8x128xf32>
    %2 = tpu.matmul %0, %1, %cst {dimension_numbers = #tpu.dot_dimension_numbers<[1], [0], [0], [1], [0, 0, 1, 1], [], []>} : vector<8x64xbf16>, vector<64x128xbf16>, vector<8x128xf32> -> vector<8x128xf32>
    %c0_3 = arith.constant 0 : index
    %c0_4 = arith.constant 0 : index
    %3 = vector.load %arg3[%c0_3, %c0_4] : memref<1x128xf32, #tpu.memory_space<vmem>>, vector<1x128xf32>
    %4 = vector.broadcast %3 : vector<1x128xf32> to vector<8x128xf32>
    %5 = arith.addf %2, %4 : vector<8x128xf32>
    %c0_5 = arith.constant 0 : index
    %c0_6 = arith.constant 0 : index
    %6 = vector.load %arg4[%c0_5, %c0_6] : memref<8x128xf32, #tpu.memory_space<vmem>>, vector<8x128xf32>
    tpu.vector_store %arg4[%c0_5, %c0_6], %5 {strides = array<i32>} : memref<8x128xf32, #tpu.memory_space<vmem>>, vector<8x128xf32>,
    return
  }
  func.func @transform_0(%arg0: i32) -> (i32, i32) {
    %c0_i32 = arith.constant 0 : i32
    %c0_i32_0 = arith.constant 0 : i32
    return %arg0, %c0_i32 : i32, i32
  }
  func.func @transform_1(%arg0: i32) -> (i32, i32) {
    %c0_i32 = arith.constant 0 : i32
    %c0_i32_0 = arith.constant 0 : i32
    %c0_i32_1 = arith.constant 0 : i32
    return %c0_i32, %c0_i32_0 : i32, i32
  }
  func.func @transform_2(%arg0: i32) -> (i32, i32) {
    %c0_i32 = arith.constant 0 : i32
    %c0_i32_0 = arith.constant 0 : i32
    %c0_i32_1 = arith.constant 0 : i32
    return %c0_i32, %c0_i32_0 : i32, i32
  }
  func.func @transform_3(%arg0: i32) -> (i32, i32) {
    %c0_i32 = arith.constant 0 : i32
    %c0_i32_0 = arith.constant 0 : i32
    return %arg0, %c0_i32 : i32, i32
  }
}

</mosaic_0001>

<llo_original>
// kernel: bert_cnn_forward.1
$region0: #{bert_cnn_forward.1}
  #allocation0 [shape = 'u32[]', space=smem, size = 0x4, offset = 0x4, fixed_abs, tag = 'smem constant byte address 0x4 - core index']
  #allocation1 [shape = 'u32[72,128]{1,0:T(1,128)}', space=vmem, size = 0x9000, scoped, tag = 'internal scratch']
  %s0 = inlined_call_operand.vmem [shape: bf16[8,64], index: 0, kind: input, shape index: {}]
  %s1 = inlined_call_operand.vmem [shape: bf16[64,128], index: 1, kind: input, shape index: {}]
  %s2 = inlined_call_operand.vmem [shape: f32[1,128], index: 2, kind: input, shape index: {}]
  %s3 = inlined_call_operand.vmem [shape: f32[8,128], index: 3, kind: output, shape index: {}]
  %s4 = sld [smem:[#allocation0]]
  $region22: #{bert_cnn_forward.1} parent=0
    _
  %s6 = ssub.s32 1, %s4
  %s7 = scalar_select 0, %s6, %s4
  // Predicated region
  $region2: #{bert_cnn_forward.1} parent=0 // pred_check
    _
  $region3: #{bert_cnn_forward.1} parent=0 // pred_check_branch
    %9 = sbr.rel (0) target = $region5
  $region4: #{bert_cnn_forward.1} parent=0 // pred_region
    _
  $region5: #{bert_cnn_forward.1} parent=0 // pred_fallthru
    _
  // Predicated region
  $region6: #{bert_cnn_forward.1} parent=0 // pred_check
    _
  $region7: #{bert_cnn_forward.1} parent=0 // pred_check_branch
    %11 = sbr.rel (0) target = $region9
  $region8: #{bert_cnn_forward.1} parent=0 // pred_region
    _
  $region9: #{bert_cnn_forward.1} parent=0 // pred_fallthru
    _
  // Predicated region
  $region10: #{bert_cnn_forward.1} parent=0 // pred_check
    _
  $region11: #{bert_cnn_forward.1} parent=0 // pred_check_branch
    %13 = sbr.rel (0) target = $region13
  $region12: #{bert_cnn_forward.1} parent=0 // pred_region
    _
  $region13: #{bert_cnn_forward.1} parent=0 // pred_fallthru
    _
  %v15 = vld [vmem:[%s0] sm:$0xf]
  %v16 = vld [vmem:[%s1] sm:$0xf]
  %v17 = vld [vmem:[%s1 + $0x4] sm:$0xf]
  %v18 = vld [vmem:[%s1 + $0x8] sm:$0xf]
  %v19 = vld [vmem:[%s1 + $0xc] sm:$0xf]
  %v20 = vld [vmem:[%s1 + $0x10] sm:$0xf]
  %v21 = vld [vmem:[%s1 + $0x14] sm:$0xf]
  %v22 = vld [vmem:[%s1 + $0x18] sm:$0xf]
  %v23 = vld [vmem:[%s1 + $0x1c] sm:$0xf]
  %v24 = vld [vmem:[%s2] sm:$0x1]
  %v26 = vperm.slane %v24, 0
  %v36 = vunpack.c.l.b16 %v16
  %v37 = vunpack.c.l.b16 %v17
  %v38 = vunpack.c.l.b16 %v18
  %v39 = vunpack.c.l.b16 %v19
  %v40 = vunpack.c.l.b16 %v20
  %v41 = vunpack.c.l.b16 %v21
  %v42 = vunpack.c.l.b16 %v22
  %v43 = vunpack.c.l.b16 %v23
  %v44 = vpack.c.b16 %v37, %v36
  %v45 = vpack.c.b16 %v39, %v38
  %v46 = vpack.c.b16 %v41, %v40
  %v47 = vpack.c.b16 %v43, %v42
  %vm52 = vcmask 523264
  %v54 = vsel %vm52, %v15, 0
  %56 = vmatpush.bf16.msra.mxu0 0
  %57 = vmatpush.bf16.msra.mxu0 0
  %58 = vmatpush.bf16.msra.mxu0 0
  %59 = vmatpush.bf16.msra.mxu0 0
  %60 = vmatpush.bf16.msra.mxu0 %v47
  %61 = vmatpush.bf16.msra.mxu0 %v46
  %62 = vmatpush.bf16.msra.mxu0 %v45
  %63 = vmatpush.bf16.msra.mxu0 %v44
  %64 = vmatmul.bf16.gmra.mxu0 %v54
  %v65 = vpop.f32.mrf.mxu0
  %v66 = vadd.f32 %v26, %v65
  %v67 = vpop.f32.mrf.mxu0
  %68 = vdwg.mxu0
  %69 = vst [vmem:[%s3] sm:$0xff] %v66
  // Predicated region
  $region14: #{bert_cnn_forward.1} parent=0 // pred_check
    _
  $region15: #{bert_cnn_forward.1} parent=0 // pred_check_branch
    %71 = sbr.rel (0) target = $region17
  $region16: #{bert_cnn_forward.1} parent=0 // pred_region
    _
  $region17: #{bert_cnn_forward.1} parent=0 // pred_fallthru
    _
  // Predicated region
  $region18: #{bert_cnn_forward.1} parent=0 // pred_check
    _
  $region19: #{bert_cnn_forward.1} parent=0 // pred_check_branch
    %73 = sbr.rel (0) target = $region21
  $region20: #{bert_cnn_forward.1} parent=0 // pred_region
    _
  $region21: #{bert_cnn_forward.1} parent=0 // pred_fallthru
    _

</llo_original>
